<compile_context>
chip_gen: v5e
topology: v5e:2x2
jax: 0.10.0
libtpu: 0.0.40
codegen_flags: <defaults>
</compile_context>

<pallas_src>
import math
from functools import partial

import jax
import jax.numpy as jnp
from jax import lax
from jax.experimental import pallas as pl
from jax.experimental.pallas import tpu as pltpu

NUM_HEADS = 16
LN_EPS = 1e-5


def _gelu_tanh(x):
    # TODO(synk): torch.nn.GELU() defaults to exact erf-GELU; the tanh
    # approximation (EUP-friendly) differs by ~1e-3, below bf16 matmul noise.
    c = 0.7978845608028654  # sqrt(2/pi)
    return 0.5 * x * (1.0 + jnp.tanh(c * (x + 0.044715 * x * x * x)))


# --------------------------------------------------------------------------- #
# Kernel 1: stealth_encoder (Linear+GELU+Linear+LayerNorm) fused with the
#           Q projection (from enc) and the packed K|V projection (from orig).
#           bf16 MXU operands, f32 accumulation, bf16 HBM intermediates.
# --------------------------------------------------------------------------- #
def _encoder_qkv_kernel(x_ref, orig_ref, w1_ref, b1_ref, w2_ref, b2_ref,
                        lng_ref, lnb_ref, wq_ref, bq_ref, wkv_ref, bkv_ref,
                        q_ref, k_ref, v_ref):
    H = q_ref.shape[-1]
    x = x_ref[...].astype(jnp.bfloat16)      # (TM, H) manipulation rows
    orig = orig_ref[...].astype(jnp.bfloat16)  # (TM, H) original rows

    # Linear(H, 2H) + GELU   (dropout is an eval-mode identity)
    h1 = jnp.dot(x, w1_ref[...], preferred_element_type=jnp.float32) + b1_ref[...]
    h1 = _gelu_tanh(h1)

    # Linear(2H, H)
    y = jnp.dot(h1.astype(jnp.bfloat16), w2_ref[...],
                preferred_element_type=jnp.float32) + b2_ref[...]

    # LayerNorm(H) in f32
    mean = jnp.mean(y, axis=-1, keepdims=True)
    yc = y - mean
    var = jnp.mean(yc * yc, axis=-1, keepdims=True)
    enc = yc * lax.rsqrt(var + LN_EPS) * lng_ref[...] + lnb_ref[...]

    # Attention input projections: q from enc, packed k|v from original_hidden.
    q = jnp.dot(enc.astype(jnp.bfloat16), wq_ref[...],
                preferred_element_type=jnp.float32) + bq_ref[...]
    kv = jnp.dot(orig, wkv_ref[...],
                 preferred_element_type=jnp.float32) + bkv_ref[...]

    q_ref[...] = q.astype(q_ref.dtype)
    k_ref[...] = kv[:, :H].astype(k_ref.dtype)
    v_ref[...] = kv[:, H:].astype(v_ref.dtype)


# --------------------------------------------------------------------------- #
# Kernel 2: grid = (batch, q-tile, head-group).  The head-group axis is an
#           "arbitrary" reduction: each group accumulates
#           softmax(q k^T / sqrt(d)) v  @  Wo^T[group rows]
#           into an f32 VMEM accumulator; the output block index is constant
#           across the group axis (standard accumulator pattern - keep the
#           reduction axis LAST if the grid is ever reordered).
# --------------------------------------------------------------------------- #
def _attn_kernel(q_ref, k_ref, v_ref, wo_ref, bo_ref, out_ref, acc_ref,
                 *, head_dim, heads_per_group):
    g = pl.program_id(2)
    tq, Gd = q_ref.shape
    H = out_ref.shape[-1]

    @pl.when(g == 0)
    def _():
        acc_ref[...] = jnp.broadcast_to(bo_ref[...], (tq, H))

    scale = 1.0 / math.sqrt(head_dim)
    # Fold 1/sqrt(d) into q once (one (tq, Gd) multiply instead of per-head (tq,S)).
    q = (q_ref[...].astype(jnp.float32) * scale).astype(jnp.bfloat16)
    k = k_ref[...]   # (S, Gd) bf16
    v = v_ref[...]   # (S, Gd) bf16

    o_parts = []
    for h in range(heads_per_group):          # static unroll, slices are free views
        lo = h * head_dim
        qh = q[:, lo:lo + head_dim]
        kh = k[:, lo:lo + head_dim]
        vh = v[:, lo:lo + head_dim]
        s = lax.dot_general(qh, kh, (((1,), (1,)), ((), ())),
                            preferred_element_type=jnp.float32)        # (tq, S)
        m = jnp.max(s, axis=-1, keepdims=True)
        p = jnp.exp(s - m)
        l = jnp.sum(p, axis=-1, keepdims=True)
        oh = jnp.dot(p.astype(jnp.bfloat16), vh,
                     preferred_element_type=jnp.float32)                # (tq, d)
        # Normalize the (tq, d) result, not the (tq, S) scores; divide on the EUP.
        o_parts.append(oh * pl.reciprocal(l, approx=True))

    o_group = jnp.concatenate(o_parts, axis=-1).astype(jnp.bfloat16)    # (tq, Gd)

    # Output projection folded in: full-depth (tq, Gd)@(Gd, H) against the
    # VMEM-resident Wo^T (constant-index block, sliced in-kernel per group).
    row0 = pl.multiple_of(g * Gd, Gd)
    wo_g = wo_ref[pl.ds(row0, Gd), :]                                    # (Gd, H) bf16
    acc_ref[...] += jnp.dot(o_group, wo_g, preferred_element_type=jnp.float32)

    @pl.when(g == pl.num_programs(2) - 1)
    def _():
        out_ref[...] = acc_ref[...].astype(out_ref.dtype)


# --------------------------------------------------------------------------- #
# Wrapper
# --------------------------------------------------------------------------- #
def _largest_tile(n, cap):
    for t in (512, 256, 128, 64, 32, 16, 8):
        if t <= cap and n % t == 0:
            return t
    # TODO(synk): awkward n with no multiple-of-8 divisor <= cap falls back to a
    # single full-extent tile (fine for the shapes this module sees).
    return n


def _pick_head_group(head_dim):
    # Group G heads so the fused output projection contracts over G*d
    # (target a multiple of 256, else 128 -> full-depth MXU), G | NUM_HEADS.
    for gd in (256, 128):
        if gd % head_dim == 0:
            g = gd // head_dim
            if g <= NUM_HEADS and NUM_HEADS % g == 0:
                return g
    return NUM_HEADS


def _clamp_vmem(nbytes):
    # Raise the scoped VMEM limit above the conservative default, but stay
    # within every generation's physical VMEM (v7x = 64 MiB).
    return int(min(max(nbytes, 32 * 1024 * 1024), 56 * 1024 * 1024))


def stealth_system_forward(manipulation_output, original_hidden, params):
    """manipulation_output, original_hidden: (S, B, H) f32. Returns (S, B, H) f32."""
    S, B, H = manipulation_output.shape
    assert H % NUM_HEADS == 0, "hidden_size must be divisible by 16 heads"
    assert H % 128 == 0, "kernel assumes a lane-aligned hidden size (multiple of 128)"
    d = H // NUM_HEADS
    M = S * B

    # ---------------- Kernel 1: encoder + Q/K/V projections ---------------- #
    tm = _largest_tile(M, 256)          # cap keeps bf16 weights + tiles in v7x VMEM
    x2 = manipulation_output.reshape(M, H)   # free reshape (no HBM copy)
    o2 = original_hidden.reshape(M, H)

    vmem1 = _clamp_vmem(
        2 * 7 * H * H * 2                           # bf16 weights, double-buffered
        + 2 * (2 * tm * H * 4 + 3 * tm * H * 2)     # f32 in / bf16 out tiles, x2 buf
        + 6 * tm * H * 4)                           # f32 temporaries headroom

    q2, k2, v2 = pl.pallas_call(
        _encoder_qkv_kernel,
        out_shape=(jax.ShapeDtypeStruct((M, H), jnp.bfloat16),
                   jax.ShapeDtypeStruct((M, H), jnp.bfloat16),
                   jax.ShapeDtypeStruct((M, H), jnp.bfloat16)),
        grid=(M // tm,),
        in_specs=[
            pl.BlockSpec((tm, H), lambda i: (i, 0)),        # manipulation rows
            pl.BlockSpec((tm, H), lambda i: (i, 0)),        # original rows
            pl.BlockSpec((H, 2 * H), lambda i: (0, 0)),     # W1^T (bf16, resident)
            pl.BlockSpec((1, 2 * H), lambda i: (0, 0)),     # b1
            pl.BlockSpec((2 * H, H), lambda i: (0, 0)),     # W2^T
            pl.BlockSpec((1, H), lambda i: (0, 0)),         # b2
            pl.BlockSpec((1, H), lambda i: (0, 0)),         # LN gamma
            pl.BlockSpec((1, H), lambda i: (0, 0)),         # LN beta
            pl.BlockSpec((H, H), lambda i: (0, 0)),         # Wq^T
            pl.BlockSpec((1, H), lambda i: (0, 0)),         # bq
            pl.BlockSpec((H, 2 * H), lambda i: (0, 0)),     # [Wk;Wv]^T
            pl.BlockSpec((1, 2 * H), lambda i: (0, 0)),     # [bk;bv]
        ],
        out_specs=(pl.BlockSpec((tm, H), lambda i: (i, 0)),
                   pl.BlockSpec((tm, H), lambda i: (i, 0)),
                   pl.BlockSpec((tm, H), lambda i: (i, 0))),
        compiler_params=pltpu.CompilerParams(
            dimension_semantics=("parallel",), vmem_limit_bytes=vmem1),
    )(x2, o2, params["w1_t"], params["b1"], params["w2_t"], params["b2"],
      params["ln_g"], params["ln_b"], params["wq_t"], params["bq"],
      params["wkv_t"], params["bkv"])

    # ---------------- Kernel 2: grouped attention + out-proj ---------------- #
    # (M, H) == (S, B*H) reshape is free; the batch / head-group split happens
    # in the BlockSpec index maps -> no XLA slices / transposes between kernels.
    G = _pick_head_group(d)
    Gd = G * d
    n_groups = NUM_HEADS // G
    tq = _largest_tile(S, 256)

    q2 = q2.reshape(S, B * H)
    k2 = k2.reshape(S, B * H)
    v2 = v2.reshape(S, B * H)

    vmem2 = _clamp_vmem(
        2 * (H * H * 2 + tq * Gd * 2 + 2 * S * Gd * 2 + tq * H * 4)
        + tq * H * 4 + 2 * tq * S * 4)

    kernel2 = partial(_attn_kernel, head_dim=d, heads_per_group=G)
    out2 = pl.pallas_call(
        kernel2,
        out_shape=jax.ShapeDtypeStruct((S, B * H), jnp.float32),
        grid=(B, S // tq, n_groups),
        in_specs=[
            pl.BlockSpec((tq, Gd), lambda b, si, g: (si, b * n_groups + g)),  # q tile
            pl.BlockSpec((S, Gd), lambda b, si, g: (0, b * n_groups + g)),    # k group
            pl.BlockSpec((S, Gd), lambda b, si, g: (0, b * n_groups + g)),    # v group
            pl.BlockSpec((H, H), lambda b, si, g: (0, 0)),                    # Wo^T resident
            pl.BlockSpec((1, H), lambda b, si, g: (0, 0)),                    # bo
        ],
        out_specs=pl.BlockSpec((tq, H), lambda b, si, g: (si, b)),
        scratch_shapes=[pltpu.VMEM((tq, H), jnp.float32)],   # out-proj accumulator
        compiler_params=pltpu.CompilerParams(
            dimension_semantics=("parallel", "parallel", "arbitrary"),
            vmem_limit_bytes=vmem2),
    )(q2, k2, v2, params["wo_t"], params["bo"])

    return out2.reshape(S, B, H)   # free reshape; store was already lane-dense


# --------------------------------------------------------------------------- #
# Params
# --------------------------------------------------------------------------- #
def init_raw_params(key, hidden_size):
    H = hidden_size
    ks = jax.random.split(key, 10)

    def unif(k, shape, fan_in):
        bound = 1.0 / math.sqrt(fan_in)
        return jax.random.uniform(k, shape, jnp.float32, -bound, bound)

    w_in = unif(ks[4], (3 * H, H), H)
    b_in = unif(ks[5], (3 * H,), H)
    return {
        "w1": unif(ks[0], (2 * H, H), H), "b1": unif(ks[1], (2 * H,), H),
        "w2": unif(ks[2], (H, 2 * H), 2 * H), "b2": unif(ks[3], (H,), 2 * H),
        "ln_g": jnp.ones((H,), jnp.float32), "ln_b": jnp.zeros((H,), jnp.float32),
        "wq": w_in[:H], "wk": w_in[H:2 * H], "wv": w_in[2 * H:],
        "bq": b_in[:H], "bk": b_in[H:2 * H], "bv": b_in[2 * H:],
        "wo": unif(ks[6], (H, H), H), "bo": unif(ks[7], (H,), H),
    }


def prepare_params(raw):
    bf = jnp.bfloat16
    wkv = jnp.concatenate([raw["wk"], raw["wv"]], axis=0)        # (2H, H)
    bkv = jnp.concatenate([raw["bk"], raw["bv"]], axis=0)        # (2H,)
    return {
        "w1_t": raw["w1"].T.astype(bf), "b1": raw["b1"].reshape(1, -1),
        "w2_t": raw["w2"].T.astype(bf), "b2": raw["b2"].reshape(1, -1),
        "ln_g": raw["ln_g"].reshape(1, -1), "ln_b": raw["ln_b"].reshape(1, -1),
        "wq_t": raw["wq"].T.astype(bf), "bq": raw["bq"].reshape(1, -1),
        "wkv_t": wkv.T.astype(bf), "bkv": bkv.reshape(1, -1),
        "wo_t": raw["wo"].T.astype(bf), "bo": raw["bo"].reshape(1, -1),
    }


# --------------------------------------------------------------------------- #
# References
# --------------------------------------------------------------------------- #
def reference_forward_matched(manip, orig, raw):
    """Plain JAX, mirroring the kernel's bf16-operand / f32-accumulate numerics."""
    bf, f32 = jnp.bfloat16, jnp.float32
    S, B, H = manip.shape
    d = H // NUM_HEADS
    scale = 1.0 / math.sqrt(d)
    mm = lambda a, w: jnp.dot(a, w.T.astype(bf), preferred_element_type=f32)

    x = manip.astype(bf)
    o = orig.astype(bf)
    h1 = _gelu_tanh(mm(x, raw["w1"]) + raw["b1"])
    y = mm(h1.astype(bf), raw["w2"]) + raw["b2"]
    mean = y.mean(-1, keepdims=True)
    yc = y - mean
    var = (yc * yc).mean(-1, keepdims=True)
    enc = yc * lax.rsqrt(var + LN_EPS) * raw["ln_g"] + raw["ln_b"]

    q = (mm(enc.astype(bf), raw["wq"]) + raw["bq"]).astype(bf)
    k = (mm(o, raw["wk"]) + raw["bk"]).astype(bf)
    v = (mm(o, raw["wv"]) + raw["bv"]).astype(bf)

    qh = (q.reshape(S, B, NUM_HEADS, d).astype(f32) * scale).astype(bf)
    kh = k.reshape(S, B, NUM_HEADS, d)
    vh = v.reshape(S, B, NUM_HEADS, d)
    s = jnp.einsum("sbhd,tbhd->bhst", qh, kh, preferred_element_type=f32)
    m = s.max(-1, keepdims=True)
    p = jnp.exp(s - m)
    l = p.sum(-1, keepdims=True)
    oh = jnp.einsum("bhst,tbhd->bhsd", p.astype(bf), vh,
                    preferred_element_type=f32) / l
    o_cat = oh.transpose(2, 0, 1, 3).reshape(S, B, H).astype(bf)
    return jnp.dot(o_cat, raw["wo"].T.astype(bf),
                   preferred_element_type=f32) + raw["bo"]


def reference_forward_f32(manip, orig, raw):
    """Full-f32 reference (matches the PyTorch eval-mode forward)."""
    P = lax.Precision.HIGHEST
    S, B, H = manip.shape
    d = H // NUM_HEADS

    h1 = _gelu_tanh(jnp.matmul(manip, raw["w1"].T, precision=P) + raw["b1"])
    y = jnp.matmul(h1, raw["w2"].T, precision=P) + raw["b2"]
    mean = y.mean(-1, keepdims=True)
    var = ((y - mean) ** 2).mean(-1, keepdims=True)
    enc = (y - mean) / jnp.sqrt(var + LN_EPS) * raw["ln_g"] + raw["ln_b"]

    q = jnp.matmul(enc, raw["wq"].T, precision=P) + raw["bq"]
    k = jnp.matmul(orig, raw["wk"].T, precision=P) + raw["bk"]
    v = jnp.matmul(orig, raw["wv"].T, precision=P) + raw["bv"]

    def heads(t):
        return t.reshape(S, B, NUM_HEADS, d).transpose(1, 2, 0, 3)

    qh, kh, vh = heads(q), heads(k), heads(v)
    scores = jnp.einsum("bhqd,bhkd->bhqk", qh, kh, precision=P) / math.sqrt(d)
    attn = jax.nn.softmax(scores, axis=-1)
    oh = jnp.einsum("bhqk,bhkd->bhqd", attn, vh, precision=P)
    o = oh.transpose(2, 0, 1, 3).reshape(S, B, H)
    return jnp.matmul(o, raw["wo"].T, precision=P) + raw["bo"]


if __name__ == "__main__":
    # (seq, batch, hidden) — torch nn.MultiheadAttention default layout.
    # hidden must be divisible by the module's hard-coded 16 heads; 128 keeps
    # the head-group / lane tiling exact while staying small.
    S, B, H = 8, 2, 128

    root = jax.random.PRNGKey(0)
    k_manip, k_orig, k_p = jax.random.split(root, 3)

    manipulation_output = jax.random.normal(k_manip, (S, B, H), dtype=jnp.float32)
    original_hidden = jax.random.normal(k_orig, (S, B, H), dtype=jnp.float32)

    raw = init_raw_params(k_p, H)
    params = prepare_params(raw)

    out = stealth_system_forward(manipulation_output, original_hidden, params)
    out = jax.block_until_ready(out)
    assert out.shape == (S, B, H)
    assert bool(jnp.all(jnp.isfinite(out)))

    ref_matched = reference_forward_matched(manipulation_output, original_hidden, raw)
    ref_f32 = reference_forward_f32(manipulation_output, original_hidden, raw)
    assert jnp.allclose(out, ref_matched, atol=5e-3, rtol=5e-3), (
        f"mismatch vs matched-precision ref: {jnp.max(jnp.abs(out - ref_matched))}")
    assert jnp.allclose(out, ref_f32, atol=5e-2, rtol=5e-2), (
        f"mismatch vs f32 ref: {jnp.max(jnp.abs(out - ref_f32))}")

    print("KERNEL_OK")
</pallas_src>

<mosaic_0001>
module attributes {stable_mosaic.version = 11 : i64} {
  func.func @_encoder_qkv_kernel(%arg0: i32, %arg1: memref<16x128xf32, #tpu.memory_space<vmem>>, %arg2: memref<16x128xf32, #tpu.memory_space<vmem>>, %arg3: memref<128x256xbf16, #tpu.memory_space<vmem>>, %arg4: memref<1x256xf32, #tpu.memory_space<vmem>>, %arg5: memref<256x128xbf16, #tpu.memory_space<vmem>>, %arg6: memref<1x128xf32, #tpu.memory_space<vmem>>, %arg7: memref<1x128xf32, #tpu.memory_space<vmem>>, %arg8: memref<1x128xf32, #tpu.memory_space<vmem>>, %arg9: memref<128x128xbf16, #tpu.memory_space<vmem>>, %arg10: memref<1x128xf32, #tpu.memory_space<vmem>>, %arg11: memref<128x256xbf16, #tpu.memory_space<vmem>>, %arg12: memref<1x256xf32, #tpu.memory_space<vmem>>, %arg13: memref<16x128xbf16, #tpu.memory_space<vmem>>, %arg14: memref<16x128xbf16, #tpu.memory_space<vmem>>, %arg15: memref<16x128xbf16, #tpu.memory_space<vmem>>) attributes {dimension_semantics = [#tpu.dimension_semantics<parallel>], iteration_bounds = array<i64: 1>, scalar_prefetch = 0 : i64, scratch_operands = 0 : i64, tpu.core_type = #tpu.core_type<tc>, window_params = [{transform_indices = @transform_0, window_bounds = array<i64: 16, 128>}, {transform_indices = @transform_1, window_bounds = array<i64: 16, 128>}, {pipeline_mode = #tpu.pipeline_mode<synchronous>, transform_indices = @transform_2, window_bounds = array<i64: 128, 256>}, {pipeline_mode = #tpu.pipeline_mode<synchronous>, transform_indices = @transform_3, window_bounds = array<i64: 1, 256>}, {pipeline_mode = #tpu.pipeline_mode<synchronous>, transform_indices = @transform_4, window_bounds = array<i64: 256, 128>}, {pipeline_mode = #tpu.pipeline_mode<synchronous>, transform_indices = @transform_5, window_bounds = array<i64: 1, 128>}, {pipeline_mode = #tpu.pipeline_mode<synchronous>, transform_indices = @transform_6, window_bounds = array<i64: 1, 128>}, {pipeline_mode = #tpu.pipeline_mode<synchronous>, transform_indices = @transform_7, window_bounds = array<i64: 1, 128>}, {pipeline_mode = #tpu.pipeline_mode<synchronous>, transform_indices = @transform_8, window_bounds = array<i64: 128, 128>}, {pipeline_mode = #tpu.pipeline_mode<synchronous>, transform_indices = @transform_9, window_bounds = array<i64: 1, 128>}, {pipeline_mode = #tpu.pipeline_mode<synchronous>, transform_indices = @transform_10, window_bounds = array<i64: 128, 256>}, {pipeline_mode = #tpu.pipeline_mode<synchronous>, transform_indices = @transform_11, window_bounds = array<i64: 1, 256>}, {transform_indices = @transform_12, window_bounds = array<i64: 16, 128>}, {transform_indices = @transform_13, window_bounds = array<i64: 16, 128>}, {transform_indices = @transform_14, window_bounds = array<i64: 16, 128>}]} {
    %c0 = arith.constant 0 : index
    %c0_0 = arith.constant 0 : index
    %0 = vector.load %arg1[%c0, %c0_0] : memref<16x128xf32, #tpu.memory_space<vmem>>, vector<16x128xf32>
    %1 = arith.truncf %0 : vector<16x128xf32> to vector<16x128xbf16>
    %c0_1 = arith.constant 0 : index
    %c0_2 = arith.constant 0 : index
    %2 = vector.load %arg2[%c0_1, %c0_2] : memref<16x128xf32, #tpu.memory_space<vmem>>, vector<16x128xf32>
    %3 = arith.truncf %2 : vector<16x128xf32> to vector<16x128xbf16>
    %c0_3 = arith.constant 0 : index
    %c0_4 = arith.constant 0 : index
    %4 = vector.load %arg3[%c0_3, %c0_4] : memref<128x256xbf16, #tpu.memory_space<vmem>>, vector<128x256xbf16>
    %cst = arith.constant dense<0.000000e+00> : vector<16x256xf32>
    %5 = tpu.matmul %1, %4, %cst {dimension_numbers = #tpu.dot_dimension_numbers<[1], [0], [0], [1], [0, 0, 1, 1], [], []>} : vector<16x128xbf16>, vector<128x256xbf16>, vector<16x256xf32> -> vector<16x256xf32>
    %c0_5 = arith.constant 0 : index
    %c0_6 = arith.constant 0 : index
    %6 = vector.load %arg4[%c0_5, %c0_6] : memref<1x256xf32, #tpu.memory_space<vmem>>, vector<1x256xf32>
    %7 = vector.broadcast %6 : vector<1x256xf32> to vector<16x256xf32>
    %8 = arith.addf %5, %7 : vector<16x256xf32>
    %cst_7 = arith.constant 5.000000e-01 : f32
    %9 = vector.broadcast %cst_7 : f32 to vector<16x256xf32>
    %10 = arith.mulf %9, %8 : vector<16x256xf32>
    %cst_8 = arith.constant 4.471500e-02 : f32
    %11 = vector.broadcast %cst_8 : f32 to vector<16x256xf32>
    %12 = arith.mulf %11, %8 : vector<16x256xf32>
    %13 = arith.mulf %12, %8 : vector<16x256xf32>
    %14 = arith.mulf %13, %8 : vector<16x256xf32>
    %15 = arith.addf %8, %14 : vector<16x256xf32>
    %cst_9 = arith.constant 0.797884583 : f32
    %16 = vector.broadcast %cst_9 : f32 to vector<16x256xf32>
    %17 = arith.mulf %16, %15 : vector<16x256xf32>
    %18 = math.tanh %17 : vector<16x256xf32>
    %cst_10 = arith.constant 1.000000e+00 : f32
    %19 = vector.broadcast %cst_10 : f32 to vector<16x256xf32>
    %20 = arith.addf %19, %18 : vector<16x256xf32>
    %21 = arith.mulf %10, %20 : vector<16x256xf32>
    %22 = arith.truncf %21 : vector<16x256xf32> to vector<16x256xbf16>
    %c0_11 = arith.constant 0 : index
    %c0_12 = arith.constant 0 : index
    %23 = vector.load %arg5[%c0_11, %c0_12] : memref<256x128xbf16, #tpu.memory_space<vmem>>, vector<256x128xbf16>
    %cst_13 = arith.constant dense<0.000000e+00> : vector<16x128xf32>
    %24 = tpu.matmul %22, %23, %cst_13 {dimension_numbers = #tpu.dot_dimension_numbers<[1], [0], [0], [1], [0, 0, 1, 1], [], []>} : vector<16x256xbf16>, vector<256x128xbf16>, vector<16x128xf32> -> vector<16x128xf32>
    %c0_14 = arith.constant 0 : index
    %c0_15 = arith.constant 0 : index
    %25 = vector.load %arg6[%c0_14, %c0_15] : memref<1x128xf32, #tpu.memory_space<vmem>>, vector<1x128xf32>
    %26 = vector.broadcast %25 : vector<1x128xf32> to vector<16x128xf32>
    %27 = arith.addf %24, %26 : vector<16x128xf32>
    %cst_16 = arith.constant dense<0.000000e+00> : vector<16xf32>
    %28 = vector.multi_reduction <add>, %27, %cst_16 [1] : vector<16x128xf32> to vector<16xf32>
    %29 = vector.shape_cast %28 : vector<16xf32> to vector<16x1xf32>
    %cst_17 = arith.constant 1.280000e+02 : f32
    %30 = vector.broadcast %cst_17 : f32 to vector<16x1xf32>
    %31 = arith.divf %29, %30 : vector<16x1xf32>
    %32 = vector.broadcast %31 : vector<16x1xf32> to vector<16x128xf32>
    %33 = arith.subf %27, %32 : vector<16x128xf32>
    %34 = arith.mulf %33, %33 : vector<16x128xf32>
    %cst_18 = arith.constant dense<0.000000e+00> : vector<16xf32>
    %35 = vector.multi_reduction <add>, %34, %cst_18 [1] : vector<16x128xf32> to vector<16xf32>
    %36 = vector.shape_cast %35 : vector<16xf32> to vector<16x1xf32>
    %cst_19 = arith.constant 1.280000e+02 : f32
    %37 = vector.broadcast %cst_19 : f32 to vector<16x1xf32>
    %38 = arith.divf %36, %37 : vector<16x1xf32>
    %cst_20 = arith.constant 9.99999974E-6 : f32
    %39 = vector.broadcast %cst_20 : f32 to vector<16x1xf32>
    %40 = arith.addf %38, %39 : vector<16x1xf32>
    %41 = math.rsqrt %40 : vector<16x1xf32>
    %42 = vector.broadcast %41 : vector<16x1xf32> to vector<16x128xf32>
    %43 = arith.mulf %33, %42 : vector<16x128xf32>
    %c0_21 = arith.constant 0 : index
    %c0_22 = arith.constant 0 : index
    %44 = vector.load %arg7[%c0_21, %c0_22] : memref<1x128xf32, #tpu.memory_space<vmem>>, vector<1x128xf32>
    %45 = vector.broadcast %44 : vector<1x128xf32> to vector<16x128xf32>
    %46 = arith.mulf %43, %45 : vector<16x128xf32>
    %c0_23 = arith.constant 0 : index
    %c0_24 = arith.constant 0 : index
    %47 = vector.load %arg8[%c0_23, %c0_24] : memref<1x128xf32, #tpu.memory_space<vmem>>, vector<1x128xf32>
    %48 = vector.broadcast %47 : vector<1x128xf32> to vector<16x128xf32>
    %49 = arith.addf %46, %48 : vector<16x128xf32>
    %50 = arith.truncf %49 : vector<16x128xf32> to vector<16x128xbf16>
    %c0_25 = arith.constant 0 : index
    %c0_26 = arith.constant 0 : index
    %51 = vector.load %arg9[%c0_25, %c0_26] : memref<128x128xbf16, #tpu.memory_space<vmem>>, vector<128x128xbf16>
    %cst_27 = arith.constant dense<0.000000e+00> : vector<16x128xf32>
    %52 = tpu.matmul %50, %51, %cst_27 {dimension_numbers = #tpu.dot_dimension_numbers<[1], [0], [0], [1], [0, 0, 1, 1], [], []>} : vector<16x128xbf16>, vector<128x128xbf16>, vector<16x128xf32> -> vector<16x128xf32>
    %c0_28 = arith.constant 0 : index
    %c0_29 = arith.constant 0 : index
    %53 = vector.load %arg10[%c0_28, %c0_29] : memref<1x128xf32, #tpu.memory_space<vmem>>, vector<1x128xf32>
    %54 = vector.broadcast %53 : vector<1x128xf32> to vector<16x128xf32>
    %55 = arith.addf %52, %54 : vector<16x128xf32>
    %c0_30 = arith.constant 0 : index
    %c0_31 = arith.constant 0 : index
    %56 = vector.load %arg11[%c0_30, %c0_31] : memref<128x256xbf16, #tpu.memory_space<vmem>>, vector<128x256xbf16>
    %cst_32 = arith.constant dense<0.000000e+00> : vector<16x256xf32>
    %57 = tpu.matmul %3, %56, %cst_32 {dimension_numbers = #tpu.dot_dimension_numbers<[1], [0], [0], [1], [0, 0, 1, 1], [], []>} : vector<16x128xbf16>, vector<128x256xbf16>, vector<16x256xf32> -> vector<16x256xf32>
    %c0_33 = arith.constant 0 : index
    %c0_34 = arith.constant 0 : index
    %58 = vector.load %arg12[%c0_33, %c0_34] : memref<1x256xf32, #tpu.memory_space<vmem>>, vector<1x256xf32>
    %59 = vector.broadcast %58 : vector<1x256xf32> to vector<16x256xf32>
    %60 = arith.addf %57, %59 : vector<16x256xf32>
    %61 = arith.truncf %55 : vector<16x128xf32> to vector<16x128xbf16>
    %c0_35 = arith.constant 0 : index
    %c0_36 = arith.constant 0 : index
    %62 = vector.load %arg13[%c0_35, %c0_36] : memref<16x128xbf16, #tpu.memory_space<vmem>>, vector<16x128xbf16>
    tpu.vector_store %arg13[%c0_35, %c0_36], %61 {strides = array<i32>} : memref<16x128xbf16, #tpu.memory_space<vmem>>, vector<16x128xbf16>,
    %63 = vector.extract_strided_slice %60 {offsets = [0, 0], sizes = [16, 128], strides = [1, 1]} : vector<16x256xf32> to vector<16x128xf32>
    %64 = arith.truncf %63 : vector<16x128xf32> to vector<16x128xbf16>
    %c0_37 = arith.constant 0 : index
    %c0_38 = arith.constant 0 : index
    %65 = vector.load %arg14[%c0_37, %c0_38] : memref<16x128xbf16, #tpu.memory_space<vmem>>, vector<16x128xbf16>
    tpu.vector_store %arg14[%c0_37, %c0_38], %64 {strides = array<i32>} : memref<16x128xbf16, #tpu.memory_space<vmem>>, vector<16x128xbf16>,
    %66 = vector.extract_strided_slice %60 {offsets = [0, 128], sizes = [16, 128], strides = [1, 1]} : vector<16x256xf32> to vector<16x128xf32>
    %67 = arith.truncf %66 : vector<16x128xf32> to vector<16x128xbf16>
    %c0_39 = arith.constant 0 : index
    %c0_40 = arith.constant 0 : index
    %68 = vector.load %arg15[%c0_39, %c0_40] : memref<16x128xbf16, #tpu.memory_space<vmem>>, vector<16x128xbf16>
    tpu.vector_store %arg15[%c0_39, %c0_40], %67 {strides = array<i32>} : memref<16x128xbf16, #tpu.memory_space<vmem>>, vector<16x128xbf16>,
    return
  }
  func.func @transform_0(%arg0: i32) -> (i32, i32) {
    %c0_i32 = arith.constant 0 : i32
    %c0_i32_0 = arith.constant 0 : i32
    return %arg0, %c0_i32 : i32, i32
  }
  func.func @transform_1(%arg0: i32) -> (i32, i32) {
    %c0_i32 = arith.constant 0 : i32
    %c0_i32_0 = arith.constant 0 : i32
    return %arg0, %c0_i32 : i32, i32
  }
  func.func @transform_2(%arg0: i32) -> (i32, i32) {
    %c0_i32 = arith.constant 0 : i32
    %c0_i32_0 = arith.constant 0 : i32
    %c0_i32_1 = arith.constant 0 : i32
    return %c0_i32, %c0_i32_0 : i32, i32
  }
  func.func @transform_3(%arg0: i32) -> (i32, i32) {
    %c0_i32 = arith.constant 0 : i32
    %c0_i32_0 = arith.constant 0 : i32
    %c0_i32_1 = arith.constant 0 : i32
    return %c0_i32, %c0_i32_0 : i32, i32
  }
  func.func @transform_4(%arg0: i32) -> (i32, i32) {
    %c0_i32 = arith.constant 0 : i32
    %c0_i32_0 = arith.constant 0 : i32
    %c0_i32_1 = arith.constant 0 : i32
    return %c0_i32, %c0_i32_0 : i32, i32
  }
  func.func @transform_5(%arg0: i32) -> (i32, i32) {
    %c0_i32 = arith.constant 0 : i32
    %c0_i32_0 = arith.constant 0 : i32
    %c0_i32_1 = arith.constant 0 : i32
    return %c0_i32, %c0_i32_0 : i32, i32
  }
  func.func @transform_6(%arg0: i32) -> (i32, i32) {
    %c0_i32 = arith.constant 0 : i32
    %c0_i32_0 = arith.constant 0 : i32
    %c0_i32_1 = arith.constant 0 : i32
    return %c0_i32, %c0_i32_0 : i32, i32
  }
  func.func @transform_7(%arg0: i32) -> (i32, i32) {
    %c0_i32 = arith.constant 0 : i32
    %c0_i32_0 = arith.constant 0 : i32
    %c0_i32_1 = arith.constant 0 : i32
    return %c0_i32, %c0_i32_0 : i32, i32
  }
  func.func @transform_8(%arg0: i32) -> (i32, i32) {
    %c0_i32 = arith.constant 0 : i32
    %c0_i32_0 = arith.constant 0 : i32
    %c0_i32_1 = arith.constant 0 : i32
    return %c0_i32, %c0_i32_0 : i32, i32
  }
  func.func @transform_9(%arg0: i32) -> (i32, i32) {
    %c0_i32 = arith.constant 0 : i32
    %c0_i32_0 = arith.constant 0 : i32
    %c0_i32_1 = arith.constant 0 : i32
    return %c0_i32, %c0_i32_0 : i32, i32
  }
  func.func @transform_10(%arg0: i32) -> (i32, i32) {
    %c0_i32 = arith.constant 0 : i32
    %c0_i32_0 = arith.constant 0 : i32
    %c0_i32_1 = arith.constant 0 : i32
    return %c0_i32, %c0_i32_0 : i32, i32
  }
  func.func @transform_11(%arg0: i32) -> (i32, i32) {
    %c0_i32 = arith.constant 0 : i32
    %c0_i32_0 = arith.constant 0 : i32
    %c0_i32_1 = arith.constant 0 : i32
    return %c0_i32, %c0_i32_0 : i32, i32
  }
  func.func @transform_12(%arg0: i32) -> (i32, i32) {
    %c0_i32 = arith.constant 0 : i32
    %c0_i32_0 = arith.constant 0 : i32
    return %arg0, %c0_i32 : i32, i32
  }
  func.func @transform_13(%arg0: i32) -> (i32, i32) {
    %c0_i32 = arith.constant 0 : i32
    %c0_i32_0 = arith.constant 0 : i32
    return %arg0, %c0_i32 : i32, i32
  }
  func.func @transform_14(%arg0: i32) -> (i32, i32) {
    %c0_i32 = arith.constant 0 : i32
    %c0_i32_0 = arith.constant 0 : i32
    return %arg0, %c0_i32 : i32, i32
  }
}

</mosaic_0001>

<llo_original>
// kernel: tpu_custom_call.1
$region0: #{tpu_custom_call.1}
  #allocation0 [shape = 'u32[]', space=smem, size = 0x4, offset = 0x4, fixed_abs, tag = 'smem constant byte address 0x4 - core index']
  #allocation1 [shape = 'u32[72,128]{1,0:T(1,128)}', space=vmem, size = 0x9000, scoped, tag = 'internal scratch']
  %s0 = inlined_call_operand.hbm [shape: f32[16,128], index: 0, kind: input, shape index: {}]
  %s1 = inlined_call_operand.hbm [shape: f32[16,128], index: 1, kind: input, shape index: {}]
  %s2 = inlined_call_operand.hbm [shape: bf16[128,256], index: 2, kind: input, shape index: {}]
  %s3 = inlined_call_operand.vmem [shape: f32[1,256], index: 3, kind: input, shape index: {}]
  %s4 = inlined_call_operand.hbm [shape: bf16[256,128], index: 4, kind: input, shape index: {}]
  %s5 = inlined_call_operand.hbm [shape: f32[1,128], index: 5, kind: input, shape index: {}]
  %s6 = inlined_call_operand.vmem [shape: f32[1,128], index: 6, kind: input, shape index: {}]
  %s7 = inlined_call_operand.vmem [shape: f32[1,128], index: 7, kind: input, shape index: {}]
  %s8 = inlined_call_operand.hbm [shape: bf16[128,128], index: 8, kind: input, shape index: {}]
  %s9 = inlined_call_operand.vmem [shape: f32[1,128], index: 9, kind: input, shape index: {}]
  %s10 = inlined_call_operand.hbm [shape: bf16[128,256], index: 10, kind: input, shape index: {}]
  %s11 = inlined_call_operand.vmem [shape: f32[1,256], index: 11, kind: input, shape index: {}]
  %s12 = inlined_call_operand.hbm [shape: bf16[16,128], index: 12, kind: output, shape index: {0}]
  %s13 = inlined_call_operand.hbm [shape: bf16[16,128], index: 13, kind: output, shape index: {1}]
  %s14 = inlined_call_operand.hbm [shape: bf16[16,128], index: 14, kind: output, shape index: {2}]
  %15 = xla_tuple %s12, %s13, %s14
  %s16 = sld [smem:[#allocation0]]
  $region102: #{tpu_custom_call.1} parent=0
    _
  %s18 = ssub.s32 1, %s16
  %s19 = scalar_select 0, %s18, %s16
  $region1: #{tpu_custom_call.1} parent=0
    #allocation2 [shape = 'u8[8192]{0}', space=vmem, size = 0x2000, scoped, tag = 'input window, operand 0, single buffered']
    #allocation3 [shape = 's32[1]{0}', space=sflag, size = 0x4, scoped, tag = 'scoped memory for tpu_custom_call.1']
    #allocation4 [shape = 's32[1]{0}', space=sflag, size = 0x4, scoped, tag = 'scoped memory for tpu_custom_call.1']
    #allocation5 [shape = 'u8[8192]{0}', space=vmem, size = 0x2000, scoped, tag = 'input window, operand 1, single buffered']
    #allocation6 [shape = 's32[1]{0}', space=sflag, size = 0x4, scoped, tag = 'scoped memory for tpu_custom_call.1']
    #allocation7 [shape = 'u8[65536]{0}', space=vmem, size = 0x10000, scoped, tag = 'input window, operand 2, single buffered']
    #allocation8 [shape = 'u8[65536]{0}', space=vmem, size = 0x10000, scoped, tag = 'input window, operand 4, single buffered']
    #allocation9 [shape = 's32[1]{0}', space=sflag, size = 0x4, scoped, tag = 'scoped memory for tpu_custom_call.1']
    #allocation10 [shape = 'u8[512]{0}', space=vmem, size = 0x400, scoped, tag = 'input window, operand 5, single buffered']
    #allocation11 [shape = 'u8[32768]{0}', space=vmem, size = 0x8000, scoped, tag = 'input window, operand 8, single buffered']
    #allocation12 [shape = 's32[1]{0}', space=sflag, size = 0x4, scoped, tag = 'scoped memory for tpu_custom_call.1']
    #allocation13 [shape = 'u8[65536]{0}', space=vmem, size = 0x10000, scoped, tag = 'input window, operand 10, single buffered']
    #allocation14 [shape = 'u8[4096]{0}', space=vmem, size = 0x1000, scoped, tag = 'output window, operand 0, single buffered']
    #allocation15 [shape = 'u8[4096]{0}', space=vmem, size = 0x1000, scoped, tag = 'output window, operand 1, single buffered']
    #allocation16 [shape = 's32[1]{0}', space=sflag, size = 0x4, scoped, tag = 'scoped memory for tpu_custom_call.1']
    #allocation17 [shape = 'u8[4096]{0}', space=vmem, size = 0x1000, scoped, tag = 'output window, operand 2, single buffered']
    %20 = vsyncpa [#allocation3], 0
    %21 = vsyncpa [#allocation6], 0
    %22 = vsyncpa [#allocation9], 0
    %23 = vsyncpa [#allocation12], 0
    %24 = vsyncpa [#allocation4], 0
    %25 = vsyncpa [#allocation16], 0
    // Predicated region
    $region2: #{tpu_custom_call.1} parent=1 // pred_check
      _
    $region3: #{tpu_custom_call.1} parent=1 // pred_check_branch
      %27 = sbr.rel (0) target = $region5
    $region4: #{tpu_custom_call.1} parent=1 // pred_region
      %29 = vsyncadd [#allocation3], 0
      %s30 = sshll.u32 %s0, 4
      %s31 = int_to_ptr.hbm [resolvable:$true] %s30
      %s32 = sshll.u32 [#allocation2], 4
      %s33 = int_to_ptr.vmem [resolvable:$true] %s32
      %38 = dma.hbm_to_vmem [thread:$0]  %s31, 256, %s33, [#allocation3], 128, 128, 8
    $region5: #{tpu_custom_call.1} parent=1 // pred_fallthru
      _
    // Predicated region
    $region6: #{tpu_custom_call.1} parent=1 // pred_check
      _
    $region7: #{tpu_custom_call.1} parent=1 // pred_check_branch
      %40 = sbr.rel (0) target = $region9
    $region8: #{tpu_custom_call.1} parent=1 // pred_region
      %42 = vsyncadd [#allocation6], 0
      %s43 = sshll.u32 %s1, 4
      %s44 = int_to_ptr.hbm [resolvable:$true] %s43
      %s45 = sshll.u32 [#allocation5], 4
      %s46 = int_to_ptr.vmem [resolvable:$true] %s45
      %51 = dma.hbm_to_vmem [thread:$0]  %s44, 256, %s46, [#allocation6], 128, 128, 8
    $region9: #{tpu_custom_call.1} parent=1 // pred_fallthru
      _
    // Predicated region
    $region10: #{tpu_custom_call.1} parent=1 // pred_check
      _
    $region11: #{tpu_custom_call.1} parent=1 // pred_check_branch
      %53 = sbr.rel (0) target = $region13
    $region12: #{tpu_custom_call.1} parent=1 // pred_region
      %55 = vsyncadd [#allocation6], 0
      %s56 = sshll.u32 %s2, 4
      %s57 = int_to_ptr.hbm [resolvable:$true] %s56
      %s58 = sshll.u32 [#allocation7], 4
      %s59 = int_to_ptr.vmem [resolvable:$true] %s58
      %64 = dma.hbm_to_vmem [thread:$0]  %s57, 2048, %s59, [#allocation6], 128, 128, 8
    $region13: #{tpu_custom_call.1} parent=1 // pred_fallthru
      _
    // Predicated region
    $region14: #{tpu_custom_call.1} parent=1 // pred_check
      _
    $region15: #{tpu_custom_call.1} parent=1 // pred_check_branch
      %66 = sbr.rel (0) target = $region17
    $region16: #{tpu_custom_call.1} parent=1 // pred_region
      _
    $region17: #{tpu_custom_call.1} parent=1 // pred_fallthru
      _
    // Predicated region
    $region18: #{tpu_custom_call.1} parent=1 // pred_check
      _
    $region19: #{tpu_custom_call.1} parent=1 // pred_check_branch
      %68 = sbr.rel (0) target = $region21
    $region20: #{tpu_custom_call.1} parent=1 // pred_region
      %70 = vsyncadd [#allocation9], 0
      %s71 = sshll.u32 %s4, 4
      %s72 = int_to_ptr.hbm [resolvable:$true] %s71
      %s73 = sshll.u32 [#allocation8], 4
      %s74 = int_to_ptr.vmem [resolvable:$true] %s73
      %79 = dma.hbm_to_vmem [thread:$0]  %s72, 2048, %s74, [#allocation9], 64, 64, 4
    $region21: #{tpu_custom_call.1} parent=1 // pred_fallthru
      _
    // Predicated region
    $region22: #{tpu_custom_call.1} parent=1 // pred_check
      _
    $region23: #{tpu_custom_call.1} parent=1 // pred_check_branch
      %81 = sbr.rel (0) target = $region25
    $region24: #{tpu_custom_call.1} parent=1 // pred_region
      %83 = vsyncadd [#allocation9], 0
      %s85 = sshll.u32 %s5, 4
      %s86 = int_to_ptr.hbm [resolvable:$true] %s85
      %s87 = sshll.u32 [#allocation10], 4
      %s88 = int_to_ptr.vmem [resolvable:$true] %s87
      %90 = dma.hbm_to_vmem [thread:$0]  %s86, 16, %s88, [#allocation9]
    $region25: #{tpu_custom_call.1} parent=1 // pred_fallthru
      _
    // Predicated region
    $region26: #{tpu_custom_call.1} parent=1 // pred_check
      _
    $region27: #{tpu_custom_call.1} parent=1 // pred_check_branch
      %92 = sbr.rel (0) target = $region29
    $region28: #{tpu_custom_call.1} parent=1 // pred_region
      _
    $region29: #{tpu_custom_call.1} parent=1 // pred_fallthru
      _
    // Predicated region
    $region30: #{tpu_custom_call.1} parent=1 // pred_check
      _
    $region31: #{tpu_custom_call.1} parent=1 // pred_check_branch
      %94 = sbr.rel (0) target = $region33
    $region32: #{tpu_custom_call.1} parent=1 // pred_region
      _
    $region33: #{tpu_custom_call.1} parent=1 // pred_fallthru
      _
    // Predicated region
    $region34: #{tpu_custom_call.1} parent=1 // pred_check
      _
    $region35: #{tpu_custom_call.1} parent=1 // pred_check_branch
      %96 = sbr.rel (0) target = $region37
    $region36: #{tpu_custom_call.1} parent=1 // pred_region
      %98 = vsyncadd [#allocation12], 0
      %s99 = sshll.u32 %s8, 4
      %s100 = int_to_ptr.hbm [resolvable:$true] %s99
      %s101 = sshll.u32 [#allocation11], 4
      %s102 = int_to_ptr.vmem [resolvable:$true] %s101
      %107 = dma.hbm_to_vmem [thread:$0]  %s100, 1024, %s102, [#allocation12], 64, 64, 4
    $region37: #{tpu_custom_call.1} parent=1 // pred_fallthru
      _
    // Predicated region
    $region38: #{tpu_custom_call.1} parent=1 // pred_check
      _
    $region39: #{tpu_custom_call.1} parent=1 // pred_check_branch
      %109 = sbr.rel (0) target = $region41
    $region40: #{tpu_custom_call.1} parent=1 // pred_region
      _
    $region41: #{tpu_custom_call.1} parent=1 // pred_fallthru
      _
    // Predicated region
    $region42: #{tpu_custom_call.1} parent=1 // pred_check
      _
    $region43: #{tpu_custom_call.1} parent=1 // pred_check_branch
      %111 = sbr.rel (0) target = $region45
    $region44: #{tpu_custom_call.1} parent=1 // pred_region
      %113 = vsyncadd [#allocation12], 0
      %s114 = sshll.u32 %s10, 4
      %s115 = int_to_ptr.hbm [resolvable:$true] %s114
      %s116 = sshll.u32 [#allocation13], 4
      %s117 = int_to_ptr.vmem [resolvable:$true] %s116
      %122 = dma.hbm_to_vmem [thread:$0]  %s115, 2048, %s117, [#allocation12], 128, 128, 8
    $region45: #{tpu_custom_call.1} parent=1 // pred_fallthru
      _
    // Predicated region
    $region46: #{tpu_custom_call.1} parent=1 // pred_check
      _
    $region47: #{tpu_custom_call.1} parent=1 // pred_check_branch
      %124 = sbr.rel (0) target = $region49
    $region48: #{tpu_custom_call.1} parent=1 // pred_region
      _
    $region49: #{tpu_custom_call.1} parent=1 // pred_fallthru
      _
    // Predicated region
    $region50: #{tpu_custom_call.1} parent=1 // pred_check
      _
    $region51: #{tpu_custom_call.1} parent=1 // pred_check_branch
      %126 = sbr.rel (0) target = $region53
    $region52: #{tpu_custom_call.1} parent=1 // pred_region
      %128 = dma.done [#allocation3], 256
    $region53: #{tpu_custom_call.1} parent=1 // pred_fallthru
      _
    // Predicated region
    $region54: #{tpu_custom_call.1} parent=1 // pred_check
      _
    $region55: #{tpu_custom_call.1} parent=1 // pred_check_branch
      %130 = sbr.rel (0) target = $region57
    $region56: #{tpu_custom_call.1} parent=1 // pred_region
      %132 = dma.done [#allocation6], 256
    $region57: #{tpu_custom_call.1} parent=1 // pred_fallthru
      _
    // Predicated region
    $region58: #{tpu_custom_call.1} parent=1 // pred_check
      _
    $region59: #{tpu_custom_call.1} parent=1 // pred_check_branch
      %134 = sbr.rel (0) target = $region61
    $region60: #{tpu_custom_call.1} parent=1 // pred_region
      %136 = dma.done [#allocation6], 2048
    $region61: #{tpu_custom_call.1} parent=1 // pred_fallthru
      _
    // Predicated region
    $region62: #{tpu_custom_call.1} parent=1 // pred_check
      _
    $region63: #{tpu_custom_call.1} parent=1 // pred_check_branch
      %138 = sbr.rel (0) target = $region65
    $region64: #{tpu_custom_call.1} parent=1 // pred_region
      %140 = dma.done [#allocation9], 2048
    $region65: #{tpu_custom_call.1} parent=1 // pred_fallthru
      _
    // Predicated region
    $region66: #{tpu_custom_call.1} parent=1 // pred_check
      _
    $region67: #{tpu_custom_call.1} parent=1 // pred_check_branch
      %142 = sbr.rel (0) target = $region69
    $region68: #{tpu_custom_call.1} parent=1 // pred_region
      %144 = dma.done [#allocation9], 16
    $region69: #{tpu_custom_call.1} parent=1 // pred_fallthru
      _
    // Predicated region
    $region70: #{tpu_custom_call.1} parent=1 // pred_check
      _
    $region71: #{tpu_custom_call.1} parent=1 // pred_check_branch
      %146 = sbr.rel (0) target = $region73
    $region72: #{tpu_custom_call.1} parent=1 // pred_region
      %148 = dma.done [#allocation12], 1024
    $region73: #{tpu_custom_call.1} parent=1 // pred_fallthru
      _
    // Predicated region
    $region74: #{tpu_custom_call.1} parent=1 // pred_check
      _
    $region75: #{tpu_custom_call.1} parent=1 // pred_check_branch
      %150 = sbr.rel (0) target = $region77
    $region76: #{tpu_custom_call.1} parent=1 // pred_region
      %152 = dma.done [#allocation12], 2048
    $region77: #{tpu_custom_call.1} parent=1 // pred_fallthru
      _
    %v153 = vld [vmem:[#allocation2] sm:$0xff]
    %v154 = vld [vmem:[#allocation2 + $0x8] sm:$0xff]
    %v155 = vpack.c.bf16 %v154, %v153
    %v156 = vld [vmem:[#allocation5] sm:$0xff]
    %v157 = vld [vmem:[#allocation5 + $0x8] sm:$0xff]
    %v158 = vpack.c.bf16 %v157, %v156
    %v159 = vld [vmem:[#allocation7] sm:$0xff]
    %v160 = vld [vmem:[#allocation7 + $0x8] sm:$0xff]
    %v161 = vld [vmem:[#allocation7 + $0x10] sm:$0xff]
    %v162 = vld [vmem:[#allocation7 + $0x18] sm:$0xff]
    %v163 = vld [vmem:[#allocation7 + $0x20] sm:$0xff]
    %v164 = vld [vmem:[#allocation7 + $0x28] sm:$0xff]
    %v165 = vld [vmem:[#allocation7 + $0x30] sm:$0xff]
    %v166 = vld [vmem:[#allocation7 + $0x38] sm:$0xff]
    %v167 = vld [vmem:[#allocation7 + $0x40] sm:$0xff]
    %v168 = vld [vmem:[#allocation7 + $0x48] sm:$0xff]
    %v169 = vld [vmem:[#allocation7 + $0x50] sm:$0xff]
    %v170 = vld [vmem:[#allocation7 + $0x58] sm:$0xff]
    %v171 = vld [vmem:[#allocation7 + $0x60] sm:$0xff]
    %v172 = vld [vmem:[#allocation7 + $0x68] sm:$0xff]
    %v173 = vld [vmem:[#allocation7 + $0x70] sm:$0xff]
    %v174 = vld [vmem:[#allocation7 + $0x78] sm:$0xff]
    %v175 = vld [vmem:[%s3] sm:$0x3]
    %v177 = vperm.slane %v175, 0
    %v178 = vperm.slane %v175, 1
    %v197 = vunpack.c.l.b16 %v159
    %v198 = vunpack.c.h.b16 %v159
    %v199 = vunpack.c.l.b16 %v160
    %v200 = vunpack.c.h.b16 %v160
    %v201 = vunpack.c.l.b16 %v161
    %v202 = vunpack.c.h.b16 %v161
    %v203 = vunpack.c.l.b16 %v162
    %v204 = vunpack.c.h.b16 %v162
    %v205 = vunpack.c.l.b16 %v163
    %v206 = vunpack.c.h.b16 %v163
    %v207 = vunpack.c.l.b16 %v164
    %v208 = vunpack.c.h.b16 %v164
    %v209 = vunpack.c.l.b16 %v165
    %v210 = vunpack.c.h.b16 %v165
    %v211 = vunpack.c.l.b16 %v166
    %v212 = vunpack.c.h.b16 %v166
    %v213 = vunpack.c.l.b16 %v167
    %v214 = vunpack.c.h.b16 %v167
    %v215 = vunpack.c.l.b16 %v168
    %v216 = vunpack.c.h.b16 %v168
    %v217 = vunpack.c.l.b16 %v169
    %v218 = vunpack.c.h.b16 %v169
    %v219 = vunpack.c.l.b16 %v170
    %v220 = vunpack.c.h.b16 %v170
    %v221 = vunpack.c.l.b16 %v171
    %v222 = vunpack.c.h.b16 %v171
    %v223 = vunpack.c.l.b16 %v172
    %v224 = vunpack.c.h.b16 %v172
    %v225 = vunpack.c.l.b16 %v173
    %v226 = vunpack.c.h.b16 %v173
    %v227 = vunpack.c.l.b16 %v174
    %v228 = vunpack.c.h.b16 %v174
    %v229 = vpack.c.b16 %v199, %v197
    %v230 = vpack.c.b16 %v200, %v198
    %v231 = vpack.c.b16 %v203, %v201
    %v232 = vpack.c.b16 %v204, %v202
    %v233 = vpack.c.b16 %v207, %v205
    %v234 = vpack.c.b16 %v208, %v206
    %v235 = vpack.c.b16 %v211, %v209
    %v236 = vpack.c.b16 %v212, %v210
    %v237 = vpack.c.b16 %v215, %v213
    %v238 = vpack.c.b16 %v216, %v214
    %v239 = vpack.c.b16 %v219, %v217
    %v240 = vpack.c.b16 %v220, %v218
    %v241 = vpack.c.b16 %v223, %v221
    %v242 = vpack.c.b16 %v224, %v222
    %v243 = vpack.c.b16 %v227, %v225
    %v244 = vpack.c.b16 %v228, %v226
    %261 = vmatpush.bf16.msra.mxu0 %v243
    %262 = vmatpush.bf16.msra.mxu0 %v241
    %263 = vmatpush.bf16.msra.mxu0 %v239
    %264 = vmatpush.bf16.msra.mxu0 %v237
    %265 = vmatpush.bf16.msra.mxu0 %v235
    %266 = vmatpush.bf16.msra.mxu0 %v233
    %267 = vmatpush.bf16.msra.mxu0 %v231
    %268 = vmatpush.bf16.msra.mxu0 %v229
    %269 = vmatmul.bf16.gmra.mxu0 %v155
    %v270 = vpop.f32.mrf.mxu0
    %v271 = vadd.f32 %v177, %v270
    %v272 = vpop.f32.mrf.mxu0
    %v273 = vadd.f32 %v177, %v272
    %274 = vdwg.mxu0
    %275 = vmatpush.bf16.msra.mxu0 %v244
    %276 = vmatpush.bf16.msra.mxu0 %v242
    %277 = vmatpush.bf16.msra.mxu0 %v240
    %278 = vmatpush.bf16.msra.mxu0 %v238
    %279 = vmatpush.bf16.msra.mxu0 %v236
    %280 = vmatpush.bf16.msra.mxu0 %v234
    %281 = vmatpush.bf16.msra.mxu0 %v232
    %282 = vmatpush.bf16.msra.mxu0 %v230
    %283 = vmatmul.bf16.gmra.mxu0 %v155
    %v284 = vpop.f32.mrf.mxu0
    %v285 = vadd.f32 %v178, %v284
    %v286 = vpop.f32.mrf.mxu0
    %v287 = vadd.f32 %v178, %v286
    %288 = vdwg.mxu0
    %v289 = vmul.f32 %v271, 0.5
    %v290 = vmul.f32 %v285, 0.5
    %v291 = vmul.f32 %v273, 0.5
    %v292 = vmul.f32 %v287, 0.5
    %v293 = vmul.f32 %v271, 0.044715
    %v294 = vmul.f32 %v285, 0.044715
    %v295 = vmul.f32 %v273, 0.044715
    %v296 = vmul.f32 %v287, 0.044715
    %v297 = vmul.f32 %v293, %v271
    %v298 = vmul.f32 %v294, %v285
    %v299 = vmul.f32 %v295, %v273
    %v300 = vmul.f32 %v296, %v287
    %v301 = vmul.f32 %v297, %v271
    %v302 = vmul.f32 %v298, %v285
    %v303 = vmul.f32 %v299, %v273
    %v304 = vmul.f32 %v300, %v287
    %v305 = vadd.f32 %v271, %v301
    %v306 = vadd.f32 %v285, %v302
    %v307 = vadd.f32 %v273, %v303
    %v308 = vadd.f32 %v287, %v304
    %v309 = vmul.f32 %v305, 0.7978846
    %v310 = vmul.f32 %v306, 0.7978846
    %v311 = vmul.f32 %v307, 0.7978846
    %v312 = vmul.f32 %v308, 0.7978846
    %v313 = vtanh.pop %v309
    %v314 = vtanh.pop %v310
    %v315 = vtanh.pop %v311
    %v316 = vtanh.pop %v312
    %v317 = vadd.f32 %v313, 1.0
    %v318 = vadd.f32 %v314, 1.0
    %v319 = vadd.f32 %v315, 1.0
    %v320 = vadd.f32 %v316, 1.0
    %v321 = vmul.f32 %v289, %v317
    %v322 = vmul.f32 %v290, %v318
    %v323 = vmul.f32 %v291, %v319
    %v324 = vmul.f32 %v292, %v320
    %v325 = vpack.c.bf16 %v323, %v321
    %v326 = vpack.c.bf16 %v324, %v322
    %v327 = vld [vmem:[#allocation8] sm:$0xf]
    %v328 = vld [vmem:[#allocation8 + $0x4] sm:$0xf]
    %v329 = vld [vmem:[#allocation8 + $0x8] sm:$0xf]
    %v330 = vld [vmem:[#allocation8 + $0xc] sm:$0xf]
    %v331 = vld [vmem:[#allocation8 + $0x10] sm:$0xf]
    %v332 = vld [vmem:[#allocation8 + $0x14] sm:$0xf]
    %v333 = vld [vmem:[#allocation8 + $0x18] sm:$0xf]
    %v334 = vld [vmem:[#allocation8 + $0x1c] sm:$0xf]
    %v335 = vld [vmem:[#allocation8 + $0x20] sm:$0xf]
    %v336 = vld [vmem:[#allocation8 + $0x24] sm:$0xf]
    %v337 = vld [vmem:[#allocation8 + $0x28] sm:$0xf]
    %v338 = vld [vmem:[#allocation8 + $0x2c] sm:$0xf]
    %v339 = vld [vmem:[#allocation8 + $0x30] sm:$0xf]
    %v340 = vld [vmem:[#allocation8 + $0x34] sm:$0xf]
    %v341 = vld [vmem:[#allocation8 + $0x38] sm:$0xf]
    %v342 = vld [vmem:[#allocation8 + $0x3c] sm:$0xf]
    %v343 = vld [vmem:[#allocation8 + $0x40] sm:$0xf]
    %v344 = vld [vmem:[#allocation8 + $0x44] sm:$0xf]
    %v345 = vld [vmem:[#allocation8 + $0x48] sm:$0xf]
    %v346 = vld [vmem:[#allocation8 + $0x4c] sm:$0xf]
    %v347 = vld [vmem:[#allocation8 + $0x50] sm:$0xf]
    %v348 = vld [vmem:[#allocation8 + $0x54] sm:$0xf]
    %v349 = vld [vmem:[#allocation8 + $0x58] sm:$0xf]
    %v350 = vld [vmem:[#allocation8 + $0x5c] sm:$0xf]
    %v351 = vld [vmem:[#allocation8 + $0x60] sm:$0xf]
    %v352 = vld [vmem:[#allocation8 + $0x64] sm:$0xf]
    %v353 = vld [vmem:[#allocation8 + $0x68] sm:$0xf]
    %v354 = vld [vmem:[#allocation8 + $0x6c] sm:$0xf]
    %v355 = vld [vmem:[#allocation8 + $0x70] sm:$0xf]
    %v356 = vld [vmem:[#allocation8 + $0x74] sm:$0xf]
    %v357 = vld [vmem:[#allocation8 + $0x78] sm:$0xf]
    %v358 = vld [vmem:[#allocation8 + $0x7c] sm:$0xf]
    %v359 = vld [vmem:[#allocation10] sm:$0x1]
    %v361 = vperm.slane %v359, 0
    %v395 = vunpack.c.l.b16 %v327
    %v396 = vunpack.c.l.b16 %v328
    %v397 = vunpack.c.l.b16 %v329
    %v398 = vunpack.c.l.b16 %v330
    %v399 = vunpack.c.l.b16 %v331
    %v400 = vunpack.c.l.b16 %v332
    %v401 = vunpack.c.l.b16 %v333
    %v402 = vunpack.c.l.b16 %v334
    %v403 = vunpack.c.l.b16 %v335
    %v404 = vunpack.c.l.b16 %v336
    %v405 = vunpack.c.l.b16 %v337
    %v406 = vunpack.c.l.b16 %v338
    %v407 = vunpack.c.l.b16 %v339
    %v408 = vunpack.c.l.b16 %v340
    %v409 = vunpack.c.l.b16 %v341
    %v410 = vunpack.c.l.b16 %v342
    %v411 = vunpack.c.l.b16 %v343
    %v412 = vunpack.c.l.b16 %v344
    %v413 = vunpack.c.l.b16 %v345
    %v414 = vunpack.c.l.b16 %v346
    %v415 = vunpack.c.l.b16 %v347
    %v416 = vunpack.c.l.b16 %v348
    %v417 = vunpack.c.l.b16 %v349
    %v418 = vunpack.c.l.b16 %v350
    %v419 = vunpack.c.l.b16 %v351
    %v420 = vunpack.c.l.b16 %v352
    %v421 = vunpack.c.l.b16 %v353
    %v422 = vunpack.c.l.b16 %v354
    %v423 = vunpack.c.l.b16 %v355
    %v424 = vunpack.c.l.b16 %v356
    %v425 = vunpack.c.l.b16 %v357
    %v426 = vunpack.c.l.b16 %v358
    %v427 = vpack.c.b16 %v396, %v395
    %v428 = vpack.c.b16 %v398, %v397
    %v429 = vpack.c.b16 %v400, %v399
    %v430 = vpack.c.b16 %v402, %v401
    %v431 = vpack.c.b16 %v404, %v403
    %v432 = vpack.c.b16 %v406, %v405
    %v433 = vpack.c.b16 %v408, %v407
    %v434 = vpack.c.b16 %v410, %v409
    %v435 = vpack.c.b16 %v412, %v411
    %v436 = vpack.c.b16 %v414, %v413
    %v437 = vpack.c.b16 %v416, %v415
    %v438 = vpack.c.b16 %v418, %v417
    %v439 = vpack.c.b16 %v420, %v419
    %v440 = vpack.c.b16 %v422, %v421
    %v441 = vpack.c.b16 %v424, %v423
    %v442 = vpack.c.b16 %v426, %v425
    %459 = vmatpush.bf16.msra.mxu0 %v434
    %460 = vmatpush.bf16.msra.mxu0 %v433
    %461 = vmatpush.bf16.msra.mxu0 %v432
    %462 = vmatpush.bf16.msra.mxu0 %v431
    %463 = vmatpush.bf16.msra.mxu0 %v430
    %464 = vmatpush.bf16.msra.mxu0 %v429
    %465 = vmatpush.bf16.msra.mxu0 %v428
    %466 = vmatpush.bf16.msra.mxu0 %v427
    %467 = vmatmul.bf16.gmra.mxu0 %v325
    %v468 = vpop.f32.mrf.mxu0
    %v469 = vadd.f32 %v361, %v468
    %v470 = vpop.f32.mrf.mxu0
    %v471 = vadd.f32 %v361, %v470
    %472 = vdwg.mxu0
    %473 = vmatpush.bf16.msra.mxu0 %v442
    %474 = vmatpush.bf16.msra.mxu0 %v441
    %475 = vmatpush.bf16.msra.mxu0 %v440
    %476 = vmatpush.bf16.msra.mxu0 %v439
    %477 = vmatpush.bf16.msra.mxu0 %v438
    %478 = vmatpush.bf16.msra.mxu0 %v437
    %479 = vmatpush.bf16.msra.mxu0 %v436
    %480 = vmatpush.bf16.msra.mxu0 %v435
    %481 = vmatmul.bf16.gmra.mxu0 %v326
    %v482 = vpop.f32.mrf.mxu0
    %v483 = vadd.f32 %v469, %v482
    %v484 = vpop.f32.mrf.mxu0
    %v485 = vadd.f32 %v471, %v484
    %486 = vdwg.mxu0
    %487 = vadd.xlane.f32.xlu0 %v483
    %v488 = vpop.xlane.xlu0 %487
    %489 = vadd.xlane.f32.xlu0 %v485
    %v490 = vpop.xlane.xlu0 %489
    %v491 = vrcp.pop 128.0
    %v492 = vmul.f32 128.0, %v491
    %v493 = vsub.f32 1.0, %v492
    %v494 = vmul.f32 %v491, %v493
    %v495 = vadd.f32 %v491, %v494
    %vm496 = vweird.f32 %v491
    %v497 = vsel %vm496, %v491, %v495
    %v498 = vmul.f32 %v488, %v497
    %v499 = vmul.f32 %v490, %v497
    %v500 = vsub.f32 %v483, %v498
    %v501 = vsub.f32 %v485, %v499
    %v502 = vmul.f32 %v500, %v500
    %v503 = vmul.f32 %v501, %v501
    %504 = vadd.xlane.f32.xlu0 %v502
    %v505 = vpop.xlane.xlu0 %504
    %506 = vadd.xlane.f32.xlu0 %v503
    %v507 = vpop.xlane.xlu0 %506
    %v508 = vmul.f32 %v505, %v497
    %v509 = vmul.f32 %v507, %v497
    %v510 = vadd.f32 %v508, 1e-05
    %v511 = vadd.f32 %v509, 1e-05
    %v512 = vrsqrt.pop %v510
    %v513 = vmul.f32 %v512, %v510
    %v514 = vmul.f32 %v513, %v512
    %v515 = vmul.f32 0.5, %v514
    %v516 = vsub.f32 1.5, %v515
    %v517 = vmul.f32 %v512, %v516
    %vm518 = vweird.f32 %v510
    %vm519 = vweird.f32 %v512
    %vm520 = vmor %vm518, %vm519
    %v521 = vsel %vm520, %v512, %v517
    %v522 = vrsqrt.pop %v511
    %v523 = vmul.f32 %v522, %v511
    %v524 = vmul.f32 %v523, %v522
    %v525 = vmul.f32 0.5, %v524
    %v526 = vsub.f32 1.5, %v525
    %v527 = vmul.f32 %v522, %v526
    %vm528 = vweird.f32 %v511
    %vm529 = vweird.f32 %v522
    %vm530 = vmor %vm528, %vm529
    %v531 = vsel %vm530, %v522, %v527
    %v532 = vmul.f32 %v500, %v521
    %v533 = vmul.f32 %v501, %v531
    %v534 = vld [vmem:[%s6] sm:$0x1]
    %v536 = vperm.slane %v534, 0
    %v538 = vmul.f32 %v532, %v536
    %v539 = vmul.f32 %v533, %v536
    %v540 = vld [vmem:[%s7] sm:$0x1]
    %v542 = vperm.slane %v540, 0
    %v544 = vadd.f32 %v538, %v542
    %v545 = vadd.f32 %v539, %v542
    %v546 = vpack.c.bf16 %v545, %v544
    %v547 = vld [vmem:[#allocation11] sm:$0xf]
    %v548 = vld [vmem:[#allocation11 + $0x4] sm:$0xf]
    %v549 = vld [vmem:[#allocation11 + $0x8] sm:$0xf]
    %v550 = vld [vmem:[#allocation11 + $0xc] sm:$0xf]
    %v551 = vld [vmem:[#allocation11 + $0x10] sm:$0xf]
    %v552 = vld [vmem:[#allocation11 + $0x14] sm:$0xf]
    %v553 = vld [vmem:[#allocation11 + $0x18] sm:$0xf]
    %v554 = vld [vmem:[#allocation11 + $0x1c] sm:$0xf]
    %v555 = vld [vmem:[#allocation11 + $0x20] sm:$0xf]
    %v556 = vld [vmem:[#allocation11 + $0x24] sm:$0xf]
    %v557 = vld [vmem:[#allocation11 + $0x28] sm:$0xf]
    %v558 = vld [vmem:[#allocation11 + $0x2c] sm:$0xf]
    %v559 = vld [vmem:[#allocation11 + $0x30] sm:$0xf]
    %v560 = vld [vmem:[#allocation11 + $0x34] sm:$0xf]
    %v561 = vld [vmem:[#allocation11 + $0x38] sm:$0xf]
    %v562 = vld [vmem:[#allocation11 + $0x3c] sm:$0xf]
    %v563 = vld [vmem:[%s9] sm:$0x1]
    %v565 = vperm.slane %v563, 0
    %v583 = vunpack.c.l.b16 %v547
    %v584 = vunpack.c.l.b16 %v548
    %v585 = vunpack.c.l.b16 %v549
    %v586 = vunpack.c.l.b16 %v550
    %v587 = vunpack.c.l.b16 %v551
    %v588 = vunpack.c.l.b16 %v552
    %v589 = vunpack.c.l.b16 %v553
    %v590 = vunpack.c.l.b16 %v554
    %v591 = vunpack.c.l.b16 %v555
    %v592 = vunpack.c.l.b16 %v556
    %v593 = vunpack.c.l.b16 %v557
    %v594 = vunpack.c.l.b16 %v558
    %v595 = vunpack.c.l.b16 %v559
    %v596 = vunpack.c.l.b16 %v560
    %v597 = vunpack.c.l.b16 %v561
    %v598 = vunpack.c.l.b16 %v562
    %v599 = vpack.c.b16 %v584, %v583
    %v600 = vpack.c.b16 %v586, %v585
    %v601 = vpack.c.b16 %v588, %v587
    %v602 = vpack.c.b16 %v590, %v589
    %v603 = vpack.c.b16 %v592, %v591
    %v604 = vpack.c.b16 %v594, %v593
    %v605 = vpack.c.b16 %v596, %v595
    %v606 = vpack.c.b16 %v598, %v597
    %615 = vmatpush.bf16.msra.mxu0 %v606
    %616 = vmatpush.bf16.msra.mxu0 %v605
    %617 = vmatpush.bf16.msra.mxu0 %v604
    %618 = vmatpush.bf16.msra.mxu0 %v603
    %619 = vmatpush.bf16.msra.mxu0 %v602
    %620 = vmatpush.bf16.msra.mxu0 %v601
    %621 = vmatpush.bf16.msra.mxu0 %v600
    %622 = vmatpush.bf16.msra.mxu0 %v599
    %623 = vmatmul.bf16.gmra.mxu0 %v546
    %v624 = vpop.f32.mrf.mxu0
    %v625 = vadd.f32 %v565, %v624
    %v626 = vpop.f32.mrf.mxu0
    %v627 = vadd.f32 %v565, %v626
    %628 = vdwg.mxu0
    %v629 = vld [vmem:[#allocation13] sm:$0xff]
    %v630 = vld [vmem:[#allocation13 + $0x8] sm:$0xff]
    %v631 = vld [vmem:[#allocation13 + $0x10] sm:$0xff]
    %v632 = vld [vmem:[#allocation13 + $0x18] sm:$0xff]
    %v633 = vld [vmem:[#allocation13 + $0x20] sm:$0xff]
    %v634 = vld [vmem:[#allocation13 + $0x28] sm:$0xff]
    %v635 = vld [vmem:[#allocation13 + $0x30] sm:$0xff]
    %v636 = vld [vmem:[#allocation13 + $0x38] sm:$0xff]
    %v637 = vld [vmem:[#allocation13 + $0x40] sm:$0xff]
    %v638 = vld [vmem:[#allocation13 + $0x48] sm:$0xff]
    %v639 = vld [vmem:[#allocation13 + $0x50] sm:$0xff]
    %v640 = vld [vmem:[#allocation13 + $0x58] sm:$0xff]
    %v641 = vld [vmem:[#allocation13 + $0x60] sm:$0xff]
    %v642 = vld [vmem:[#allocation13 + $0x68] sm:$0xff]
    %v643 = vld [vmem:[#allocation13 + $0x70] sm:$0xff]
    %v644 = vld [vmem:[#allocation13 + $0x78] sm:$0xff]
    %v645 = vld [vmem:[%s11] sm:$0x3]
    %v647 = vperm.slane %v645, 0
    %v648 = vperm.slane %v645, 1
    %v667 = vunpack.c.l.b16 %v629
    %v668 = vunpack.c.h.b16 %v629
    %v669 = vunpack.c.l.b16 %v630
    %v670 = vunpack.c.h.b16 %v630
    %v671 = vunpack.c.l.b16 %v631
    %v672 = vunpack.c.h.b16 %v631
    %v673 = vunpack.c.l.b16 %v632
    %v674 = vunpack.c.h.b16 %v632
    %v675 = vunpack.c.l.b16 %v633
    %v676 = vunpack.c.h.b16 %v633
    %v677 = vunpack.c.l.b16 %v634
    %v678 = vunpack.c.h.b16 %v634
    %v679 = vunpack.c.l.b16 %v635
    %v680 = vunpack.c.h.b16 %v635
    %v681 = vunpack.c.l.b16 %v636
    %v682 = vunpack.c.h.b16 %v636
    %v683 = vunpack.c.l.b16 %v637
    %v684 = vunpack.c.h.b16 %v637
    %v685 = vunpack.c.l.b16 %v638
    %v686 = vunpack.c.h.b16 %v638
    %v687 = vunpack.c.l.b16 %v639
    %v688 = vunpack.c.h.b16 %v639
    %v689 = vunpack.c.l.b16 %v640
    %v690 = vunpack.c.h.b16 %v640
    %v691 = vunpack.c.l.b16 %v641
    %v692 = vunpack.c.h.b16 %v641
    %v693 = vunpack.c.l.b16 %v642
    %v694 = vunpack.c.h.b16 %v642
    %v695 = vunpack.c.l.b16 %v643
    %v696 = vunpack.c.h.b16 %v643
    %v697 = vunpack.c.l.b16 %v644
    %v698 = vunpack.c.h.b16 %v644
    %v699 = vpack.c.b16 %v669, %v667
    %v700 = vpack.c.b16 %v670, %v668
    %v701 = vpack.c.b16 %v673, %v671
    %v702 = vpack.c.b16 %v674, %v672
    %v703 = vpack.c.b16 %v677, %v675
    %v704 = vpack.c.b16 %v678, %v676
    %v705 = vpack.c.b16 %v681, %v679
    %v706 = vpack.c.b16 %v682, %v680
    %v707 = vpack.c.b16 %v685, %v683
    %v708 = vpack.c.b16 %v686, %v684
    %v709 = vpack.c.b16 %v689, %v687
    %v710 = vpack.c.b16 %v690, %v688
    %v711 = vpack.c.b16 %v693, %v691
    %v712 = vpack.c.b16 %v694, %v692
    %v713 = vpack.c.b16 %v697, %v695
    %v714 = vpack.c.b16 %v698, %v696
    %731 = vmatpush.bf16.msra.mxu0 %v713
    %732 = vmatpush.bf16.msra.mxu0 %v711
    %733 = vmatpush.bf16.msra.mxu0 %v709
    %734 = vmatpush.bf16.msra.mxu0 %v707
    %735 = vmatpush.bf16.msra.mxu0 %v705
    %736 = vmatpush.bf16.msra.mxu0 %v703
    %737 = vmatpush.bf16.msra.mxu0 %v701
    %738 = vmatpush.bf16.msra.mxu0 %v699
    %739 = vmatmul.bf16.gmra.mxu0 %v158
    %v740 = vpop.f32.mrf.mxu0
    %v741 = vadd.f32 %v647, %v740
    %v742 = vpop.f32.mrf.mxu0
    %v743 = vadd.f32 %v647, %v742
    %744 = vdwg.mxu0
    %745 = vmatpush.bf16.msra.mxu0 %v714
    %746 = vmatpush.bf16.msra.mxu0 %v712
    %747 = vmatpush.bf16.msra.mxu0 %v710
    %748 = vmatpush.bf16.msra.mxu0 %v708
    %749 = vmatpush.bf16.msra.mxu0 %v706
    %750 = vmatpush.bf16.msra.mxu0 %v704
    %751 = vmatpush.bf16.msra.mxu0 %v702
    %752 = vmatpush.bf16.msra.mxu0 %v700
    %753 = vmatmul.bf16.gmra.mxu0 %v158
    %v754 = vpop.f32.mrf.mxu0
    %v755 = vadd.f32 %v648, %v754
    %v756 = vpop.f32.mrf.mxu0
    %v757 = vadd.f32 %v648, %v756
    %758 = vdwg.mxu0
    %v759 = vpack.c.bf16 %v625, %v625
    %v760 = vpack.c.bf16 %v627, %v627
    %761 = vst [vmem:[#allocation14] sm:$0xf] %v759
    %762 = vst [vmem:[#allocation14 + $0x4] sm:$0xf] %v760
    %v763 = vpack.c.bf16 %v741, %v741
    %v764 = vpack.c.bf16 %v743, %v743
    %765 = vst [vmem:[#allocation15] sm:$0xf] %v763
    %766 = vst [vmem:[#allocation15 + $0x4] sm:$0xf] %v764
    %v767 = vpack.c.bf16 %v755, %v755
    %v768 = vpack.c.bf16 %v757, %v757
    %769 = vst [vmem:[#allocation17] sm:$0xf] %v767
    %770 = vst [vmem:[#allocation17 + $0x4] sm:$0xf] %v768
    // Predicated region
    $region78: #{tpu_custom_call.1} parent=1 // pred_check
      _
    $region79: #{tpu_custom_call.1} parent=1 // pred_check_branch
      %772 = sbr.rel (0) target = $region81
    $region80: #{tpu_custom_call.1} parent=1 // pred_region
      %774 = vsyncadd [#allocation4], 0
      %s775 = sshll.u32 [#allocation14], 4
      %s776 = int_to_ptr.vmem [resolvable:$true] %s775
      %s777 = sshll.u32 %s12, 4
      %s778 = int_to_ptr.hbm [resolvable:$true] %s777
      %783 = dma.vmem_to_hbm [thread:$0]  %s776, 128, %s778, [#allocation4], 64, 64, 4
    $region81: #{tpu_custom_call.1} parent=1 // pred_fallthru
      _
    // Predicated region
    $region82: #{tpu_custom_call.1} parent=1 // pred_check
      _
    $region83: #{tpu_custom_call.1} parent=1 // pred_check_branch
      %785 = sbr.rel (0) target = $region85
    $region84: #{tpu_custom_call.1} parent=1 // pred_region
      %787 = vsyncadd [#allocation16], 0
      %s788 = sshll.u32 [#allocation15], 4
      %s789 = int_to_ptr.vmem [resolvable:$true] %s788
      %s790 = sshll.u32 %s13, 4
      %s791 = int_to_ptr.hbm [resolvable:$true] %s790
      %796 = dma.vmem_to_hbm [thread:$0]  %s789, 128, %s791, [#allocation16], 64, 64, 4
    $region85: #{tpu_custom_call.1} parent=1 // pred_fallthru
      _
    // Predicated region
    $region86: #{tpu_custom_call.1} parent=1 // pred_check
      _
    $region87: #{tpu_custom_call.1} parent=1 // pred_check_branch
      %798 = sbr.rel (0) target = $region89
    $region88: #{tpu_custom_call.1} parent=1 // pred_region
      %800 = vsyncadd [#allocation16], 0
      %s801 = sshll.u32 [#allocation17], 4
      %s802 = int_to_ptr.vmem [resolvable:$true] %s801
      %s803 = sshll.u32 %s14, 4
      %s804 = int_to_ptr.hbm [resolvable:$true] %s803
      %809 = dma.vmem_to_hbm [thread:$0]  %s802, 128, %s804, [#allocation16], 64, 64, 4
    $region89: #{tpu_custom_call.1} parent=1 // pred_fallthru
      _
    // Predicated region
    $region90: #{tpu_custom_call.1} parent=1 // pred_check
      _
    $region91: #{tpu_custom_call.1} parent=1 // pred_check_branch
      %811 = sbr.rel (0) target = $region93
    $region92: #{tpu_custom_call.1} parent=1 // pred_region
      %813 = dma.done [#allocation4], 128
    $region93: #{tpu_custom_call.1} parent=1 // pred_fallthru
      _
    // Predicated region
    $region94: #{tpu_custom_call.1} parent=1 // pred_check
      _
    $region95: #{tpu_custom_call.1} parent=1 // pred_check_branch
      %815 = sbr.rel (0) target = $region97
    $region96: #{tpu_custom_call.1} parent=1 // pred_region
      %817 = dma.done [#allocation16], 128
    $region97: #{tpu_custom_call.1} parent=1 // pred_fallthru
      _
    // Predicated region
    $region98: #{tpu_custom_call.1} parent=1 // pred_check
      _
    $region99: #{tpu_custom_call.1} parent=1 // pred_check_branch
      %819 = sbr.rel (0) target = $region101
    $region100: #{tpu_custom_call.1} parent=1 // pred_region
      %821 = dma.done [#allocation16], 128
    $region101: #{tpu_custom_call.1} parent=1 // pred_fallthru
      _
    %822 = vsyncpa [#allocation3], 1
    %823 = vsyncpa [#allocation6], 1
    %824 = vsyncpa [#allocation9], 1
    %825 = vsyncpa [#allocation12], 1
    %826 = vsyncpa [#allocation4], 1
    %827 = vsyncpa [#allocation16], 1

</llo_original>
